<compile_context>
chip_gen: v6e
topology: v6e:2x2x1
jax: 0.10.0
libtpu: 0.0.40
codegen_flags: <defaults>
</compile_context>

<pallas_src>
import functools

import jax
import jax.numpy as jnp
from jax.experimental import pallas as pl
from jax.experimental.pallas import tpu as pltpu

EPS = 1e-5


def _mlp_block_resnet_kernel(x_lhs_ref, wt_ref, x_res_ref, params_ref,
                             o_ref, acc_ref, *, n_valid_rows):
    """Grid = (feature_tiles, k_tiles); k (contraction) is the last grid axis.

    x_lhs_ref  : (Bp, TK)  K-tile of the padded input (matmul LHS)
    wt_ref     : (TK, TN)  tile of W^T
    x_res_ref  : (Bp, TN)  N-tile of the padded input (residual branch)
    params_ref : (3,  TN)  rows = [bias, gamma, beta]
    o_ref      : (Bp, TN)  output tile
    acc_ref    : (Bp, TN)  f32 accumulator scratch (resident across k)
    """
    k = pl.program_id(1)

    @pl.when(k == 0)
    def _():
        acc_ref[...] = jnp.zeros_like(acc_ref)

    acc_ref[...] += jnp.dot(x_lhs_ref[...], wt_ref[...],
                            preferred_element_type=jnp.float32)

    @pl.when(k == pl.num_programs(1) - 1)
    def _():
        bias = params_ref[0:1, :]
        gamma = params_ref[1:2, :]
        beta = params_ref[2:3, :]

        h = acc_ref[...] + bias                       # (Bp, TN) f32

        # BatchNorm1d (training): batch stats over the *valid* rows only,
        # biased variance, single pass (sum and sum of squares).
        bp, tn = h.shape
        if n_valid_rows == bp:
            hm = h
        else:
            row = jax.lax.broadcasted_iota(jnp.int32, (bp, tn), 0)
            hm = jnp.where(row < n_valid_rows, h, 0.0)
        inv_n = jnp.float32(1.0 / n_valid_rows)
        mean = jnp.sum(hm, axis=0, keepdims=True) * inv_n
        ex2 = jnp.sum(hm * hm, axis=0, keepdims=True) * inv_n
        var = ex2 - mean * mean

        bn = (h - mean) * jax.lax.rsqrt(var + EPS) * gamma + beta
        y = jnp.maximum(bn, 0.0)                      # ReLU

        o_ref[...] = (x_res_ref[...].astype(jnp.float32) + y).astype(o_ref.dtype)


def _round_up(v, m):
    return (v + m - 1) // m * m


def mlp_block_resnet(x, wt, b, gamma, beta, *, matmul_in_bf16=False):
    """x: (B, D).  wt: (in_dim, out_dim) = W^T (pre-transposed at init time)."""
    B, D = x.shape
    assert wt.shape == (D, D), "residual add requires in_dim == out_dim"

    tile = 128 if D <= 128 else 256        # MXU/lane aligned; fits v7x VMEM budget
    Dp = _round_up(D, tile)
    Bp = _round_up(B, 8)
    TN = TK = tile
    n_tiles, k_tiles = Dp // TN, Dp // TK

    # Pad to tile-aligned shapes (zero padding; padded rows masked in BN stats,
    # padded feature columns are inert and sliced off at the end).
    x_res = jnp.pad(x, ((0, Bp - B), (0, Dp - D)))
    wt_p = jnp.pad(wt, ((0, Dp - D), (0, Dp - D)))
    x_lhs = x_res
    if matmul_in_bf16:
        x_lhs = x_lhs.astype(jnp.bfloat16)
        wt_p = wt_p.astype(jnp.bfloat16)

    # Pack bias / gamma / beta into one parameter slab: one DMA instead of three.
    params = jnp.zeros((3, Dp), jnp.float32)
    params = params.at[0, :D].set(b.astype(jnp.float32))
    params = params.at[1, :D].set(gamma.astype(jnp.float32))
    params = params.at[2, :D].set(beta.astype(jnp.float32))

    kernel = functools.partial(_mlp_block_resnet_kernel, n_valid_rows=B)

    out = pl.pallas_call(
        kernel,
        out_shape=jax.ShapeDtypeStruct((Bp, Dp), x.dtype),
        grid_spec=pltpu.PrefetchScalarGridSpec(
            num_scalar_prefetch=0,
            grid=(n_tiles, k_tiles),
            in_specs=[
                pl.BlockSpec((Bp, TK), lambda j, k: (0, k)),   # x as matmul LHS
                pl.BlockSpec((TK, TN), lambda j, k: (k, j)),   # W^T tile
                pl.BlockSpec((Bp, TN), lambda j, k: (0, j)),   # x as residual
                pl.BlockSpec((3, TN), lambda j, k: (0, j)),    # [b, gamma, beta]
            ],
            out_specs=pl.BlockSpec((Bp, TN), lambda j, k: (0, j)),
            scratch_shapes=[pltpu.VMEM((Bp, TN), jnp.float32)],
        ),
        compiler_params=pltpu.CompilerParams(
            dimension_semantics=("parallel", "arbitrary")),
    )(x_lhs, wt_p, x_res, params)

    return out[:B, :D]


def _reference(x, w, b, gamma, beta):
    h = jnp.matmul(x, w.T, precision=jax.lax.Precision.HIGHEST) + b
    mean = jnp.mean(h, axis=0, keepdims=True)
    var = jnp.mean((h - mean) ** 2, axis=0, keepdims=True)
    bn = (h - mean) / jnp.sqrt(var + EPS) * gamma + beta
    return x + jnp.maximum(bn, 0.0)


def _make_inputs(key, B, D):
    kx, kw, kb = jax.random.split(key, 3)
    x = jax.random.normal(kx, (B, D), dtype=jnp.float32)
    bound = 1.0 / jnp.sqrt(jnp.float32(D))
    w = jax.random.uniform(kw, (D, D), dtype=jnp.float32, minval=-bound, maxval=bound)
    b = jax.random.uniform(kb, (D,), dtype=jnp.float32, minval=-bound, maxval=bound)
    gamma = jnp.ones((D,), dtype=jnp.float32)   # BatchNorm1d weight init
    beta = jnp.zeros((D,), dtype=jnp.float32)   # BatchNorm1d bias init
    return x, w, b, gamma, beta


if __name__ == "__main__":
    key = jax.random.PRNGKey(0)

    # 1) Small baseline shape (batch=8, in_dim=out_dim=32).
    x, w, b, gamma, beta = _make_inputs(key, 8, 32)
    wt = jnp.asarray(w.T)   # weight pre-transposed ONCE at parameter-init time
    out = jax.block_until_ready(mlp_block_resnet(x, wt, b, gamma, beta))
    ref = _reference(x, w, b, gamma, beta)
    assert out.shape == (8, 32)
    assert jnp.allclose(out, ref, atol=1e-4, rtol=1e-4), "mismatch (8, 32)"

    # 2) Non-multiple-of-8 batch: exercises the padded-row BN mask.
    x, w, b, gamma, beta = _make_inputs(jax.random.PRNGKey(1), 6, 32)
    wt = jnp.asarray(w.T)
    out = jax.block_until_ready(mlp_block_resnet(x, wt, b, gamma, beta))
    ref = _reference(x, w, b, gamma, beta)
    assert out.shape == (6, 32)
    assert jnp.allclose(out, ref, atol=1e-4, rtol=1e-4), "mismatch (6, 32)"

    # 3) Multi-tile grid (D=384 -> padded 512 -> 2x2 grid): exercises the
    #    K-accumulator and N-tiled BN path.
    x, w, b, gamma, beta = _make_inputs(jax.random.PRNGKey(2), 16, 384)
    wt = jnp.asarray(w.T)
    out = jax.block_until_ready(mlp_block_resnet(x, wt, b, gamma, beta))
    ref = _reference(x, w, b, gamma, beta)
    assert out.shape == (16, 384)
    assert jnp.allclose(out, ref, atol=2e-4, rtol=1e-3), "mismatch (16, 384)"

    print("KERNEL_OK")
</pallas_src>

<mosaic_0001>
module attributes {stable_mosaic.version = 11 : i64} {
  func.func @_mlp_block_resnet_kernel(%arg0: i32, %arg1: i32, %arg2: memref<8x128xf32, #tpu.memory_space<vmem>>, %arg3: memref<128x128xf32, #tpu.memory_space<vmem>>, %arg4: memref<8x128xf32, #tpu.memory_space<vmem>>, %arg5: memref<3x128xf32, #tpu.memory_space<vmem>>, %arg6: memref<8x128xf32, #tpu.memory_space<vmem>>, %arg7: memref<8x128xf32, #tpu.memory_space<vmem>>) attributes {dimension_semantics = [#tpu.dimension_semantics<parallel>, #tpu.dimension_semantics<arbitrary>], iteration_bounds = array<i64: 1, 1>, scalar_prefetch = 0 : i64, scratch_operands = 1 : i64, tpu.core_type = #tpu.core_type<tc>, window_params = [{transform_indices = @transform_0, window_bounds = array<i64: 8, 128>}, {transform_indices = @transform_1, window_bounds = array<i64: 128, 128>}, {transform_indices = @transform_2, window_bounds = array<i64: 8, 128>}, {transform_indices = @transform_3, window_bounds = array<i64: 3, 128>}, {transform_indices = @transform_4, window_bounds = array<i64: 8, 128>}]} {
    %c0_i32 = arith.constant 0 : i32
    %0 = arith.cmpi eq, %arg1, %c0_i32 : i32
    %1 = arith.extui %0 : i1 to i32
    %c0_i32_0 = arith.constant 0 : i32
    %2 = arith.cmpi ne, %1, %c0_i32_0 : i32
    scf.if %2 {
      %cst_10 = arith.constant 0.000000e+00 : f32
      %12 = vector.broadcast %cst_10 : f32 to vector<8x128xf32>
      %c0_11 = arith.constant 0 : index
      %c0_12 = arith.constant 0 : index
      %13 = vector.load %arg7[%c0_11, %c0_12] : memref<8x128xf32, #tpu.memory_space<vmem>>, vector<8x128xf32>
      tpu.vector_store %arg7[%c0_11, %c0_12], %12 {strides = array<i32>} : memref<8x128xf32, #tpu.memory_space<vmem>>, vector<8x128xf32>,
    } else {
    }
    %c0 = arith.constant 0 : index
    %c0_1 = arith.constant 0 : index
    %3 = vector.load %arg7[%c0, %c0_1] : memref<8x128xf32, #tpu.memory_space<vmem>>, vector<8x128xf32>
    %c0_2 = arith.constant 0 : index
    %c0_3 = arith.constant 0 : index
    %4 = vector.load %arg2[%c0_2, %c0_3] : memref<8x128xf32, #tpu.memory_space<vmem>>, vector<8x128xf32>
    %c0_4 = arith.constant 0 : index
    %c0_5 = arith.constant 0 : index
    %5 = vector.load %arg3[%c0_4, %c0_5] : memref<128x128xf32, #tpu.memory_space<vmem>>, vector<128x128xf32>
    %cst = arith.constant dense<0.000000e+00> : vector<8x128xf32>
    %6 = tpu.matmul %4, %5, %cst {dimension_numbers = #tpu.dot_dimension_numbers<[1], [0], [0], [1], [0, 0, 1, 1], [], []>} : vector<8x128xf32>, vector<128x128xf32>, vector<8x128xf32> -> vector<8x128xf32>
    %7 = arith.addf %3, %6 : vector<8x128xf32>
    %c0_6 = arith.constant 0 : index
    %c0_7 = arith.constant 0 : index
    %8 = vector.load %arg7[%c0_6, %c0_7] : memref<8x128xf32, #tpu.memory_space<vmem>>, vector<8x128xf32>
    tpu.vector_store %arg7[%c0_6, %c0_7], %7 {strides = array<i32>} : memref<8x128xf32, #tpu.memory_space<vmem>>, vector<8x128xf32>,
    %c0_i32_8 = arith.constant 0 : i32
    %9 = arith.cmpi eq, %arg1, %c0_i32_8 : i32
    %10 = arith.extui %9 : i1 to i32
    %c0_i32_9 = arith.constant 0 : i32
    %11 = arith.cmpi ne, %10, %c0_i32_9 : i32
    scf.if %11 {
      %c0_10 = arith.constant 0 : index
      %c0_11 = arith.constant 0 : index
      %12 = vector.load %arg5[%c0_10, %c0_11] : memref<3x128xf32, #tpu.memory_space<vmem>>, vector<1x128xf32>
      %c1 = arith.constant 1 : index
      %c0_12 = arith.constant 0 : index
      %13 = vector.load %arg5[%c1, %c0_12] : memref<3x128xf32, #tpu.memory_space<vmem>>, vector<1x128xf32>
      %c2 = arith.constant 2 : index
      %c0_13 = arith.constant 0 : index
      %14 = vector.load %arg5[%c2, %c0_13] : memref<3x128xf32, #tpu.memory_space<vmem>>, vector<1x128xf32>
      %c0_14 = arith.constant 0 : index
      %c0_15 = arith.constant 0 : index
      %15 = vector.load %arg7[%c0_14, %c0_15] : memref<8x128xf32, #tpu.memory_space<vmem>>, vector<8x128xf32>
      %16 = vector.broadcast %12 : vector<1x128xf32> to vector<8x128xf32>
      %17 = arith.addf %15, %16 : vector<8x128xf32>
      %cst_16 = arith.constant dense<0.000000e+00> : vector<128xf32>
      %18 = vector.multi_reduction <add>, %17, %cst_16 [0] : vector<8x128xf32> to vector<128xf32>
      %19 = vector.shape_cast %18 : vector<128xf32> to vector<1x128xf32>
      %cst_17 = arith.constant 1.250000e-01 : f32
      %20 = vector.broadcast %cst_17 : f32 to vector<1x128xf32>
      %21 = arith.mulf %19, %20 : vector<1x128xf32>
      %22 = arith.mulf %17, %17 : vector<8x128xf32>
      %cst_18 = arith.constant dense<0.000000e+00> : vector<128xf32>
      %23 = vector.multi_reduction <add>, %22, %cst_18 [0] : vector<8x128xf32> to vector<128xf32>
      %24 = vector.shape_cast %23 : vector<128xf32> to vector<1x128xf32>
      %cst_19 = arith.constant 1.250000e-01 : f32
      %25 = vector.broadcast %cst_19 : f32 to vector<1x128xf32>
      %26 = arith.mulf %24, %25 : vector<1x128xf32>
      %27 = arith.mulf %21, %21 : vector<1x128xf32>
      %28 = arith.subf %26, %27 : vector<1x128xf32>
      %29 = vector.broadcast %21 : vector<1x128xf32> to vector<8x128xf32>
      %30 = arith.subf %17, %29 : vector<8x128xf32>
      %cst_20 = arith.constant 9.99999974E-6 : f32
      %31 = vector.broadcast %cst_20 : f32 to vector<1x128xf32>
      %32 = arith.addf %28, %31 : vector<1x128xf32>
      %33 = math.rsqrt %32 : vector<1x128xf32>
      %34 = vector.broadcast %33 : vector<1x128xf32> to vector<8x128xf32>
      %35 = arith.mulf %30, %34 : vector<8x128xf32>
      %36 = vector.broadcast %13 : vector<1x128xf32> to vector<8x128xf32>
      %37 = arith.mulf %35, %36 : vector<8x128xf32>
      %38 = vector.broadcast %14 : vector<1x128xf32> to vector<8x128xf32>
      %39 = arith.addf %37, %38 : vector<8x128xf32>
      %cst_21 = arith.constant 0.000000e+00 : f32
      %40 = vector.broadcast %cst_21 : f32 to vector<8x128xf32>
      %41 = arith.maximumf %39, %40 : vector<8x128xf32>
      %c0_22 = arith.constant 0 : index
      %c0_23 = arith.constant 0 : index
      %42 = vector.load %arg4[%c0_22, %c0_23] : memref<8x128xf32, #tpu.memory_space<vmem>>, vector<8x128xf32>
      %43 = arith.addf %42, %41 : vector<8x128xf32>
      %c0_24 = arith.constant 0 : index
      %c0_25 = arith.constant 0 : index
      %44 = vector.load %arg6[%c0_24, %c0_25] : memref<8x128xf32, #tpu.memory_space<vmem>>, vector<8x128xf32>
      tpu.vector_store %arg6[%c0_24, %c0_25], %43 {strides = array<i32>} : memref<8x128xf32, #tpu.memory_space<vmem>>, vector<8x128xf32>,
    } else {
    }
    return
  }
  func.func @transform_0(%arg0: i32, %arg1: i32) -> (i32, i32) {
    %c0_i32 = arith.constant 0 : i32
    %c0_i32_0 = arith.constant 0 : i32
    return %c0_i32, %arg1 : i32, i32
  }
  func.func @transform_1(%arg0: i32, %arg1: i32) -> (i32, i32) {
    %c0_i32 = arith.constant 0 : i32
    return %arg1, %arg0 : i32, i32
  }
  func.func @transform_2(%arg0: i32, %arg1: i32) -> (i32, i32) {
    %c0_i32 = arith.constant 0 : i32
    %c0_i32_0 = arith.constant 0 : i32
    return %c0_i32, %arg0 : i32, i32
  }
  func.func @transform_3(%arg0: i32, %arg1: i32) -> (i32, i32) {
    %c0_i32 = arith.constant 0 : i32
    %c0_i32_0 = arith.constant 0 : i32
    return %c0_i32, %arg0 : i32, i32
  }
  func.func @transform_4(%arg0: i32, %arg1: i32) -> (i32, i32) {
    %c0_i32 = arith.constant 0 : i32
    %c0_i32_0 = arith.constant 0 : i32
    return %c0_i32, %arg0 : i32, i32
  }
}

</mosaic_0001>

<llo_original>
// kernel: tpu_custom_call.1
$region0: #{tpu_custom_call.1}
  #allocation0 [shape = 'u32[]', space=smem, size = 0x4, offset = 0x4, fixed_abs, tag = 'smem constant byte address 0x4 - core index']
  #allocation1 [shape = 'u32[144,128]{1,0:T(1,128)}', space=vmem, size = 0x12000, scoped, tag = 'internal scratch']
  #allocation2 [shape = 'f32[8,128]{1,0:T(8,128)}', space=vmem, size = 0x1000, scoped, tag = 'scratch operand']
  %s0 = inlined_call_operand.hbm [shape: f32[8,128], index: 0, kind: input, shape index: {}]
  %s1 = inlined_call_operand.hbm [shape: f32[128,128], index: 1, kind: input, shape index: {}]
  %s2 = inlined_call_operand.hbm [shape: f32[8,128], index: 2, kind: input, shape index: {}]
  %s3 = inlined_call_operand.vmem [shape: f32[3,128], index: 3, kind: input, shape index: {}]
  %s4 = inlined_call_operand.hbm [shape: f32[8,128], index: 4, kind: output, shape index: {}]
  %s5 = sld [smem:[#allocation0]]
  $region46: #{tpu_custom_call.1} parent=0
    _
  %s7 = ssub.s32 1, %s5
  %s8 = scalar_select 0, %s7, %s5
  $region1: #{tpu_custom_call.1} parent=0
    #allocation3 [shape = 'u8[4096]{0}', space=vmem, size = 0x1000, scoped, tag = 'input window, operand 0, single buffered']
    #allocation4 [shape = 's32[1]{0}', space=sflag, size = 0x4, scoped, tag = 'scoped memory for tpu_custom_call.1']
    #allocation5 [shape = 's32[1]{0}', space=sflag, size = 0x4, scoped, tag = 'scoped memory for tpu_custom_call.1']
    #allocation6 [shape = 'u8[65536]{0}', space=vmem, size = 0x10000, scoped, tag = 'input window, operand 1, single buffered']
    #allocation7 [shape = 's32[1]{0}', space=sflag, size = 0x4, scoped, tag = 'scoped memory for tpu_custom_call.1']
    #allocation8 [shape = 'u8[4096]{0}', space=vmem, size = 0x1000, scoped, tag = 'input window, operand 2, single buffered']
    #allocation9 [shape = 'u8[4096]{0}', space=vmem, size = 0x1000, scoped, tag = 'output window, operand 0, single buffered']
    %9 = vsyncpa [#allocation4], 0
    %10 = vsyncpa [#allocation7], 0
    %11 = vsyncpa [#allocation5], 0
    // Predicated region
    $region2: #{tpu_custom_call.1} parent=1 // pred_check
      _
    $region3: #{tpu_custom_call.1} parent=1 // pred_check_branch
      %13 = sbr.rel (0) target = $region5
    $region4: #{tpu_custom_call.1} parent=1 // pred_region
      %s15 = ssub.s32 128, 128
      %16 = vsyncadd [#allocation4], %s15
      %s18 = sshll.u32 [#allocation3], 4
      %s19 = int_to_ptr.vmem [resolvable:$true] %s18
      %21 = dma.hbm_to_vmem [thread:$0]  %s0, 128, %s19, [#allocation4]
    $region5: #{tpu_custom_call.1} parent=1 // pred_fallthru
      _
    // Predicated region
    $region6: #{tpu_custom_call.1} parent=1 // pred_check
      _
    $region7: #{tpu_custom_call.1} parent=1 // pred_check_branch
      %23 = sbr.rel (0) target = $region9
    $region8: #{tpu_custom_call.1} parent=1 // pred_region
      %s25 = ssub.s32 2048, 2048
      %26 = vsyncadd [#allocation7], %s25
      %s27 = sshll.u32 [#allocation6], 4
      %s28 = int_to_ptr.vmem [resolvable:$true] %s27
      %33 = dma.hbm_to_vmem [thread:$0]  %s1, 2048, %s28, [#allocation7], 128, 128, 8
    $region9: #{tpu_custom_call.1} parent=1 // pred_fallthru
      _
    // Predicated region
    $region10: #{tpu_custom_call.1} parent=1 // pred_check
      _
    $region11: #{tpu_custom_call.1} parent=1 // pred_check_branch
      %35 = sbr.rel (0) target = $region13
    $region12: #{tpu_custom_call.1} parent=1 // pred_region
      %s37 = ssub.s32 128, 128
      %38 = vsyncadd [#allocation7], %s37
      %s40 = sshll.u32 [#allocation8], 4
      %s41 = int_to_ptr.vmem [resolvable:$true] %s40
      %43 = dma.hbm_to_vmem [thread:$0]  %s2, 128, %s41, [#allocation7]
    $region13: #{tpu_custom_call.1} parent=1 // pred_fallthru
      _
    // Predicated region
    $region14: #{tpu_custom_call.1} parent=1 // pred_check
      _
    $region15: #{tpu_custom_call.1} parent=1 // pred_check_branch
      %45 = sbr.rel (0) target = $region17
    $region16: #{tpu_custom_call.1} parent=1 // pred_region
      _
    $region17: #{tpu_custom_call.1} parent=1 // pred_fallthru
      _
    // Predicated region
    $region18: #{tpu_custom_call.1} parent=1 // pred_check
      _
    $region19: #{tpu_custom_call.1} parent=1 // pred_check_branch
      %47 = sbr.rel (0) target = $region21
    $region20: #{tpu_custom_call.1} parent=1 // pred_region
      %48 = dma.done [#allocation4], 128
    $region21: #{tpu_custom_call.1} parent=1 // pred_fallthru
      _
    // Predicated region
    $region22: #{tpu_custom_call.1} parent=1 // pred_check
      _
    $region23: #{tpu_custom_call.1} parent=1 // pred_check_branch
      %50 = sbr.rel (0) target = $region25
    $region24: #{tpu_custom_call.1} parent=1 // pred_region
      %51 = dma.done [#allocation7], 2048
    $region25: #{tpu_custom_call.1} parent=1 // pred_fallthru
      _
    // Predicated region
    $region26: #{tpu_custom_call.1} parent=1 // pred_check
      _
    $region27: #{tpu_custom_call.1} parent=1 // pred_check_branch
      %53 = sbr.rel (0) target = $region29
    $region28: #{tpu_custom_call.1} parent=1 // pred_region
      %54 = dma.done [#allocation7], 128
    $region29: #{tpu_custom_call.1} parent=1 // pred_fallthru
      _
    %p55 = scmp.eq.s32.totalorder 0, 0
    // Predicated region
    $region30: #{tpu_custom_call.1} parent=1 // pred_check
      %p56 = pneg %p55
    $region31: #{tpu_custom_call.1} parent=1 // pred_check_branch
      %58 = sbr.rel (%p56) target = $region33
    $region32: #{tpu_custom_call.1} parent=1 // pred_region
      %59 = vst [vmem:[#allocation2] sm:$0xff] 0.0
    $region33: #{tpu_custom_call.1} parent=1 // pred_fallthru
      _
    %v60 = vld [vmem:[#allocation2] sm:$0xff]
    %v61 = vld [vmem:[#allocation3] sm:$0xff]
    %v62 = vld [vmem:[#allocation6] sm:$0xff]
    %v63 = vld [vmem:[#allocation6 + $0x8] sm:$0xff]
    %v64 = vld [vmem:[#allocation6 + $0x10] sm:$0xff]
    %v65 = vld [vmem:[#allocation6 + $0x18] sm:$0xff]
    %v66 = vld [vmem:[#allocation6 + $0x20] sm:$0xff]
    %v67 = vld [vmem:[#allocation6 + $0x28] sm:$0xff]
    %v68 = vld [vmem:[#allocation6 + $0x30] sm:$0xff]
    %v69 = vld [vmem:[#allocation6 + $0x38] sm:$0xff]
    %v70 = vld [vmem:[#allocation6 + $0x40] sm:$0xff]
    %v71 = vld [vmem:[#allocation6 + $0x48] sm:$0xff]
    %v72 = vld [vmem:[#allocation6 + $0x50] sm:$0xff]
    %v73 = vld [vmem:[#allocation6 + $0x58] sm:$0xff]
    %v74 = vld [vmem:[#allocation6 + $0x60] sm:$0xff]
    %v75 = vld [vmem:[#allocation6 + $0x68] sm:$0xff]
    %v76 = vld [vmem:[#allocation6 + $0x70] sm:$0xff]
    %v77 = vld [vmem:[#allocation6 + $0x78] sm:$0xff]
    %78 = vmatprep.subr.mxu0 0.0
    %79 = vmatpush1.msra.mxu0 %v77
    %80 = vmatprep.subr.mxu0 0.0
    %81 = vmatpush1.msra.mxu0 %v76
    %82 = vmatprep.subr.mxu0 0.0
    %83 = vmatpush1.msra.mxu0 %v75
    %84 = vmatprep.subr.mxu0 0.0
    %85 = vmatpush1.msra.mxu0 %v74
    %86 = vmatprep.subr.mxu0 0.0
    %87 = vmatpush1.msra.mxu0 %v73
    %88 = vmatprep.subr.mxu0 0.0
    %89 = vmatpush1.msra.mxu0 %v72
    %90 = vmatprep.subr.mxu0 0.0
    %91 = vmatpush1.msra.mxu0 %v71
    %92 = vmatprep.subr.mxu0 0.0
    %93 = vmatpush1.msra.mxu0 %v70
    %94 = vmatprep.subr.mxu0 0.0
    %95 = vmatpush1.msra.mxu0 %v69
    %96 = vmatprep.subr.mxu0 0.0
    %97 = vmatpush1.msra.mxu0 %v68
    %98 = vmatprep.subr.mxu0 0.0
    %99 = vmatpush1.msra.mxu0 %v67
    %100 = vmatprep.subr.mxu0 0.0
    %101 = vmatpush1.msra.mxu0 %v66
    %102 = vmatprep.subr.mxu0 0.0
    %103 = vmatpush1.msra.mxu0 %v65
    %104 = vmatprep.subr.mxu0 0.0
    %105 = vmatpush1.msra.mxu0 %v64
    %106 = vmatprep.subr.mxu0 0.0
    %107 = vmatpush1.msra.mxu0 %v63
    %108 = vmatprep.subr.mxu0 0.0
    %109 = vmatpush1.msra.mxu0 %v62
    %110 = vmatprep.subr.mxu0 0.0
    %111 = vmatpush2.msra.mxu0 0.0
    %112 = vmatprep.subr.mxu0 0.0
    %113 = vmatpush2.msra.mxu0 0.0
    %114 = vmatprep.subr.mxu0 0.0
    %115 = vmatpush2.msra.mxu0 0.0
    %116 = vmatprep.subr.mxu0 0.0
    %117 = vmatpush2.msra.mxu0 0.0
    %118 = vmatprep.subr.mxu0 0.0
    %119 = vmatpush2.msra.mxu0 0.0
    %120 = vmatprep.subr.mxu0 0.0
    %121 = vmatpush2.msra.mxu0 0.0
    %122 = vmatprep.subr.mxu0 0.0
    %123 = vmatpush2.msra.mxu0 0.0
    %124 = vmatprep.subr.mxu0 0.0
    %125 = vmatpush2.msra.mxu0 0.0
    %126 = vmatprep.subr.mxu0 0.0
    %127 = vmatpush2.msra.mxu0 0.0
    %128 = vmatprep.subr.mxu0 0.0
    %129 = vmatpush2.msra.mxu0 0.0
    %130 = vmatprep.subr.mxu0 0.0
    %131 = vmatpush2.msra.mxu0 0.0
    %132 = vmatprep.subr.mxu0 0.0
    %133 = vmatpush2.msra.mxu0 0.0
    %134 = vmatprep.subr.mxu0 0.0
    %135 = vmatpush2.msra.mxu0 0.0
    %136 = vmatprep.subr.mxu0 0.0
    %137 = vmatpush2.msra.mxu0 0.0
    %138 = vmatprep.subr.mxu0 0.0
    %139 = vmatpush2.msra.mxu0 0.0
    %140 = vmatprep.subr.mxu0 0.0
    %141 = vmatpush2.msra.mxu0 0.0
    %142 = vmatprep.mubr.f32.mxu0 0.0
    %143 = vmatmul.mubr.f32.gmra.mxu0 %v61
    %v144 = vpop.f32.mrf.mxu0
    %v145 = vadd.f32 0.0, %v144
    %v146 = vpop.f32.mrf.mxu0
    %147 = vdwg.mxu0
    %v148 = vadd.f32 %v60, %v145
    %149 = vst [vmem:[#allocation2] sm:$0xff] %v148
    // Predicated region
    $region34: #{tpu_custom_call.1} parent=1 // pred_check
      %p150 = pneg %p55
    $region35: #{tpu_custom_call.1} parent=1 // pred_check_branch
      %152 = sbr.rel (%p150) target = $region37
    $region36: #{tpu_custom_call.1} parent=1 // pred_region
      %v153 = vld [vmem:[%s3] sm:$0x1]
      %v154 = vld [vmem:[%s3 + $0x1] sm:$0x1]
      %v155 = vld [vmem:[%s3 + $0x2] sm:$0x1]
      %v156 = vld [vmem:[#allocation2] sm:$0xff]
      %v157 = vlaneseq
      %v158 = vshrl.u32 %v157, 7
      %v159 = vsub.s32 0, %v158
      %v160 = vrot.slane %v153, %v159
      %v161 = vadd.f32 %v156, %v160
      %v162 = vrot.slane %v161, 4
      %v163 = vadd.f32 %v161, %v162
      %v164 = vrot.slane %v163, 2
      %v165 = vadd.f32 %v163, %v164
      %v166 = vrot.slane %v165, 1
      %v167 = vadd.f32 %v165, %v166
      %v168 = vmul.f32 %v167, 0.125
      %v169 = vmul.f32 %v161, %v161
      %v170 = vrot.slane %v169, 4
      %v171 = vadd.f32 %v169, %v170
      %v172 = vrot.slane %v171, 2
      %v173 = vadd.f32 %v171, %v172
      %v174 = vrot.slane %v173, 1
      %v175 = vadd.f32 %v173, %v174
      %v176 = vmul.f32 %v175, 0.125
      %v177 = vmul.f32 %v168, %v168
      %v178 = vsub.f32 %v176, %v177
      %v179 = vsub.f32 %v161, %v168
      %v180 = vadd.f32 %v178, 1e-05
      %v181 = vrsqrt.pop %v180
      %v182 = vmul.f32 %v179, %v181
      %v183 = vlaneseq
      %v184 = vshrl.u32 %v183, 7
      %v185 = vsub.s32 0, %v184
      %v186 = vrot.slane %v154, %v185
      %v187 = vmul.f32 %v182, %v186
      %v188 = vlaneseq
      %v189 = vshrl.u32 %v188, 7
      %v190 = vsub.s32 0, %v189
      %v191 = vrot.slane %v155, %v190
      %v192 = vadd.f32 %v187, %v191
      %v193 = vmax.f32 %v192, 0.0
      %v194 = vld [vmem:[#allocation8] sm:$0xff]
      %v195 = vadd.f32 %v194, %v193
      %196 = vst [vmem:[#allocation9] sm:$0xff] %v195
    $region37: #{tpu_custom_call.1} parent=1 // pred_fallthru
      _
    // Predicated region
    $region38: #{tpu_custom_call.1} parent=1 // pred_check
      _
    $region39: #{tpu_custom_call.1} parent=1 // pred_check_branch
      %198 = sbr.rel (0) target = $region41
    $region40: #{tpu_custom_call.1} parent=1 // pred_region
      %s200 = ssub.s32 128, 128
      %201 = vsyncadd [#allocation5], %s200
      %s203 = sshll.u32 [#allocation9], 4
      %s204 = int_to_ptr.vmem [resolvable:$true] %s203
      %206 = dma.vmem_to_hbm [thread:$0]  %s204, 128, %s4, [#allocation5]
    $region41: #{tpu_custom_call.1} parent=1 // pred_fallthru
      _
    // Predicated region
    $region42: #{tpu_custom_call.1} parent=1 // pred_check
      _
    $region43: #{tpu_custom_call.1} parent=1 // pred_check_branch
      %208 = sbr.rel (0) target = $region45
    $region44: #{tpu_custom_call.1} parent=1 // pred_region
      %209 = dma.done [#allocation5], 128
    $region45: #{tpu_custom_call.1} parent=1 // pred_fallthru
      _
    %210 = vsyncpa [#allocation4], 1
    %211 = vsyncpa [#allocation7], 1
    %212 = vsyncpa [#allocation5], 1

</llo_original>
